<compile_context>
chip_gen: v6e
topology: v6e:2x2x1
jax: 0.10.0
libtpu: 0.0.40
codegen_flags: <defaults>
</compile_context>

<pallas_src>
import functools

import jax
import jax.numpy as jnp
import numpy as np
from jax.experimental import pallas as pl
from jax.experimental.pallas import tpu as pltpu


def _decoder_kernel(x_ref, w_ref, b_ref, o_ref):
    """One grid step = `b_blk` images.

    x_ref: (b_blk, Cin*K*K, Sp_pad)  im2col input (compute dtype), lane = flat output spatial
    w_ref: (Cout, Cin*K*K)           flipped/channel-swapped ConvTranspose weight
    b_ref: (Cout, 1)                 f32 bias (broadcasts over lanes)
    o_ref: (b_blk, Cout, Sp_pad)     NC-spatial output, lane-dense (Sp_pad multiple of 128)
    """
    w = w_ref[...]
    bias = b_ref[...]
    for b in range(x_ref.shape[0]):
        # Single MXU matmul per image (contraction = Cin*K*K = 36), f32 accumulation.
        y = jnp.dot(w, x_ref[b], preferred_element_type=jnp.float32)
        o_ref[b] = jnp.maximum(y + bias, 0.0).astype(o_ref.dtype)   # fused bias + ReLU


def _num_tensorcores():
    """Best-effort TensorCore count (2 on v7x, 1 on v5e/v6e); used only for grid sizing."""
    n = 1
    try:
        info = pltpu.get_tpu_info()
        for attr in ("num_cores", "core_count", "num_tensorcores", "tensor_core_count"):
            v = getattr(info, attr, None)
            if isinstance(v, int) and 0 < v <= 16:
                n = max(n, v)
    except Exception:
        pass
    try:
        dev = jax.devices()[0]
        v = getattr(dev, "num_cores", None)
        if isinstance(v, int) and 0 < v <= 16:
            n = max(n, v)
        if "v7" in str(getattr(dev, "device_kind", "")).lower():
            n = max(n, 2)
    except Exception:
        pass
    return n


def decoder_layer_pallas(x_nchw, weight, bias, *, stride=1, padding=0,
                         output_padding=0, batch_block=None,
                         compute_dtype=jnp.bfloat16):
    """ConvTranspose2d + ReLU. weight: (Cin, Cout, K, K) (PyTorch layout), bias: (Cout,)."""
    # TODO(synk): only stride=1 / output_padding=0 (the module defaults) are implemented.
    assert stride == 1 and output_padding == 0

    N, Cin, H, W = x_nchw.shape
    Cin_w, Cout, K, Kw = weight.shape
    assert Cin_w == Cin and Kw == K

    OH = (H - 1) - 2 * padding + K
    OW = (W - 1) - 2 * padding + K
    pad = K - 1 - padding
    assert pad >= 0

    Hp, Wp = H + 2 * pad, W + 2 * pad
    Sp = OH * Wp                           # flattened output spatial (keeps padded columns)
    Sp_pad = ((Sp + 127) // 128) * 128     # lane-dense width -> unmasked vst

    if batch_block is None:
        batch_block = max(1, N // _num_tensorcores())
        while N % batch_block:
            batch_block -= 1
    assert N % batch_block == 0

    # ---- wrapper-side im2col: one pad + K*K static slices + one concat (fuses under jit) ----
    max_shift = (K - 1) * Wp + (K - 1)
    need = max_shift + Sp_pad                              # flat length every tap slice needs
    extra_rows = max(0, -(-(need - Hp * Wp) // Wp))        # extra zero rows -> single jnp.pad
    xpad = jnp.pad(x_nchw, ((0, 0), (0, 0), (pad, pad + extra_rows), (pad, pad)))
    x_flat = xpad.reshape(N, Cin, (Hp + extra_rows) * Wp).astype(compute_dtype)
    x_col = jnp.concatenate(
        [x_flat[:, :, kh * Wp + kw: kh * Wp + kw + Sp_pad]
         for kh in range(K) for kw in range(K)],
        axis=1)                                            # (N, K*K*Cin, Sp_pad)

    # ConvTranspose weight -> direct-conv weight, taps stacked on the contraction dim:
    #   w_col[oc, (kh*K+kw)*Cin + ic] = weight[ic, oc, K-1-kh, K-1-kw]
    w_col = jnp.transpose(weight[:, :, ::-1, ::-1], (1, 2, 3, 0)).reshape(
        Cout, K * K * Cin).astype(compute_dtype)
    b2 = bias.reshape(Cout, 1).astype(jnp.float32)

    itemsize = np.dtype(compute_dtype).itemsize
    cost = pl.CostEstimate(
        flops=2 * N * Cout * OH * OW * Cin * K * K,
        transcendentals=0,
        bytes_accessed=(x_col.size * itemsize + w_col.size * itemsize
                        + b2.size * 4 + N * Cout * Sp_pad * x_nchw.dtype.itemsize))

    out_flat = pl.pallas_call(
        _decoder_kernel,
        out_shape=jax.ShapeDtypeStruct((N, Cout, Sp_pad), x_nchw.dtype),
        grid=(N // batch_block,),
        in_specs=[
            pl.BlockSpec((batch_block, K * K * Cin, Sp_pad), lambda n: (n, 0, 0)),
            pl.BlockSpec((Cout, K * K * Cin), lambda n: (0, 0)),
            pl.BlockSpec((Cout, 1), lambda n: (0, 0)),
        ],
        out_specs=pl.BlockSpec((batch_block, Cout, Sp_pad), lambda n: (n, 0, 0)),
        compiler_params=pltpu.CompilerParams(
            dimension_semantics=("parallel",),
            # Per-step VMEM (in + out + weights, double-buffered) is well under 1 MiB.
            vmem_limit_bytes=16 * 1024 * 1024,
        ),
        cost_estimate=cost,
    )(x_col, w_col, b2)

    # NOTE: lanes j >= OH*Wp and columns ow in [OW, Wp) hold padding / row-wrap garbage by
    # construction; never consume the raw (N, Cout, Sp_pad) buffer — crop here.
    return out_flat[:, :, :Sp].reshape(N, Cout, OH, Wp)[:, :, :, :OW]


def decoder_layer_ref(x_nchw, weight, bias):
    """Pure-JAX reference in the scatter formulation of ConvTranspose2d (stride=1, pad=0)."""
    N, Cin, H, W = x_nchw.shape
    _, Cout, K, _ = weight.shape
    OH, OW = H + K - 1, W + K - 1
    out = jnp.zeros((N, Cout, OH, OW), jnp.float32)
    xf = x_nchw.astype(jnp.float32)
    wf = weight.astype(jnp.float32)
    for kh in range(K):
        for kw in range(K):
            contrib = jnp.einsum('nchw,co->nohw', xf, wf[:, :, kh, kw])
            out = out.at[:, :, kh:kh + H, kw:kw + W].add(contrib)
    out = out + bias.astype(jnp.float32)[None, :, None, None]
    return jnp.maximum(out, 0.0)


if __name__ == "__main__":
    # Small deterministic setup: batch=2, in_channels=4, out_channels=8, spatial=16, k=3.
    N, Cin, Cout, H, W, K = 2, 4, 8, 16, 16, 3

    key = jax.random.PRNGKey(0)
    kx, kw, kb = jax.random.split(key, 3)

    x = jax.random.normal(kx, (N, Cin, H, W), dtype=jnp.float32)
    bound = 1.0 / np.sqrt(Cin * K * K)
    weight = jax.random.uniform(kw, (Cin, Cout, K, K), minval=-bound, maxval=bound,
                                dtype=jnp.float32)
    bias = jax.random.uniform(kb, (Cout,), minval=-bound, maxval=bound, dtype=jnp.float32)

    ref = jax.block_until_ready(decoder_layer_ref(x, weight, bias))

    # f32 MXU-operand path: bit-tight check against the reference.
    f32_fn = jax.jit(functools.partial(decoder_layer_pallas, compute_dtype=jnp.float32))
    out_f32 = jax.block_until_ready(f32_fn(x, weight, bias))
    assert out_f32.shape == (N, Cout, H + K - 1, W + K - 1), out_f32.shape
    np.testing.assert_allclose(np.asarray(out_f32), np.asarray(ref), rtol=1e-5, atol=1e-5)

    # Default performance path: bf16 MXU operands, f32 accumulation (looser tolerance).
    bf16_fn = jax.jit(decoder_layer_pallas)
    out_bf16 = jax.block_until_ready(bf16_fn(x, weight, bias))
    assert out_bf16.shape == (N, Cout, H + K - 1, W + K - 1), out_bf16.shape
    np.testing.assert_allclose(np.asarray(out_bf16), np.asarray(ref), rtol=5e-2, atol=5e-2)

    print("KERNEL_OK")
</pallas_src>

<mosaic_0001>
module attributes {stable_mosaic.version = 11 : i64} {
  func.func @_decoder_kernel(%arg0: i32, %arg1: memref<2x36x384xf32, #tpu.memory_space<vmem>>, %arg2: memref<8x36xf32, #tpu.memory_space<vmem>>, %arg3: memref<8x1xf32, #tpu.memory_space<vmem>>, %arg4: memref<2x8x384xf32, #tpu.memory_space<vmem>>) attributes {dimension_semantics = [#tpu.dimension_semantics<parallel>], iteration_bounds = array<i64: 1>, scalar_prefetch = 0 : i64, scratch_operands = 0 : i64, tpu.core_type = #tpu.core_type<tc>, window_params = [{transform_indices = @transform_0, window_bounds = array<i64: 2, 36, 384>}, {pipeline_mode = #tpu.pipeline_mode<synchronous>, transform_indices = @transform_1, window_bounds = array<i64: 8, 36>}, {pipeline_mode = #tpu.pipeline_mode<synchronous>, transform_indices = @transform_2, window_bounds = array<i64: 8, 1>}, {transform_indices = @transform_3, window_bounds = array<i64: 2, 8, 384>}]} {
    %c0 = arith.constant 0 : index
    %c0_0 = arith.constant 0 : index
    %0 = vector.load %arg2[%c0, %c0_0] : memref<8x36xf32, #tpu.memory_space<vmem>>, vector<8x36xf32>
    %c0_1 = arith.constant 0 : index
    %c0_2 = arith.constant 0 : index
    %1 = vector.load %arg3[%c0_1, %c0_2] : memref<8x1xf32, #tpu.memory_space<vmem>>, vector<8x1xf32>
    %c0_3 = arith.constant 0 : index
    %c0_4 = arith.constant 0 : index
    %c0_5 = arith.constant 0 : index
    %2 = vector.load %arg1[%c0_3, %c0_4, %c0_5] : memref<2x36x384xf32, #tpu.memory_space<vmem>>, vector<1x36x384xf32>
    %3 = vector.shape_cast %2 : vector<1x36x384xf32> to vector<36x384xf32>
    %cst = arith.constant dense<0.000000e+00> : vector<8x384xf32>
    %4 = tpu.matmul %0, %3, %cst {dimension_numbers = #tpu.dot_dimension_numbers<[1], [0], [0], [1], [0, 0, 1, 1], [], []>} : vector<8x36xf32>, vector<36x384xf32>, vector<8x384xf32> -> vector<8x384xf32>
    %5 = vector.broadcast %1 : vector<8x1xf32> to vector<8x384xf32>
    %6 = arith.addf %4, %5 : vector<8x384xf32>
    %cst_6 = arith.constant 0.000000e+00 : f32
    %7 = vector.broadcast %cst_6 : f32 to vector<8x384xf32>
    %8 = arith.maximumf %6, %7 : vector<8x384xf32>
    %c0_7 = arith.constant 0 : index
    %c0_8 = arith.constant 0 : index
    %c0_9 = arith.constant 0 : index
    %9 = vector.load %arg4[%c0_7, %c0_8, %c0_9] : memref<2x8x384xf32, #tpu.memory_space<vmem>>, vector<1x8x384xf32>
    %10 = vector.shape_cast %9 : vector<1x8x384xf32> to vector<8x384xf32>
    %11 = vector.shape_cast %8 : vector<8x384xf32> to vector<1x8x384xf32>
    tpu.vector_store %arg4[%c0_7, %c0_8, %c0_9], %11 {strides = array<i32>} : memref<2x8x384xf32, #tpu.memory_space<vmem>>, vector<1x8x384xf32>,
    %c1 = arith.constant 1 : index
    %c0_10 = arith.constant 0 : index
    %c0_11 = arith.constant 0 : index
    %12 = vector.load %arg1[%c1, %c0_10, %c0_11] : memref<2x36x384xf32, #tpu.memory_space<vmem>>, vector<1x36x384xf32>
    %13 = vector.shape_cast %12 : vector<1x36x384xf32> to vector<36x384xf32>
    %cst_12 = arith.constant dense<0.000000e+00> : vector<8x384xf32>
    %14 = tpu.matmul %0, %13, %cst_12 {dimension_numbers = #tpu.dot_dimension_numbers<[1], [0], [0], [1], [0, 0, 1, 1], [], []>} : vector<8x36xf32>, vector<36x384xf32>, vector<8x384xf32> -> vector<8x384xf32>
    %15 = vector.broadcast %1 : vector<8x1xf32> to vector<8x384xf32>
    %16 = arith.addf %14, %15 : vector<8x384xf32>
    %cst_13 = arith.constant 0.000000e+00 : f32
    %17 = vector.broadcast %cst_13 : f32 to vector<8x384xf32>
    %18 = arith.maximumf %16, %17 : vector<8x384xf32>
    %c1_14 = arith.constant 1 : index
    %c0_15 = arith.constant 0 : index
    %c0_16 = arith.constant 0 : index
    %19 = vector.load %arg4[%c1_14, %c0_15, %c0_16] : memref<2x8x384xf32, #tpu.memory_space<vmem>>, vector<1x8x384xf32>
    %20 = vector.shape_cast %19 : vector<1x8x384xf32> to vector<8x384xf32>
    %21 = vector.shape_cast %18 : vector<8x384xf32> to vector<1x8x384xf32>
    tpu.vector_store %arg4[%c1_14, %c0_15, %c0_16], %21 {strides = array<i32>} : memref<2x8x384xf32, #tpu.memory_space<vmem>>, vector<1x8x384xf32>,
    return
  }
  func.func @transform_0(%arg0: i32) -> (i32, i32, i32) {
    %c0_i32 = arith.constant 0 : i32
    %c0_i32_0 = arith.constant 0 : i32
    %c0_i32_1 = arith.constant 0 : i32
    return %arg0, %c0_i32, %c0_i32_0 : i32, i32, i32
  }
  func.func @transform_1(%arg0: i32) -> (i32, i32) {
    %c0_i32 = arith.constant 0 : i32
    %c0_i32_0 = arith.constant 0 : i32
    %c0_i32_1 = arith.constant 0 : i32
    return %c0_i32, %c0_i32_0 : i32, i32
  }
  func.func @transform_2(%arg0: i32) -> (i32, i32) {
    %c0_i32 = arith.constant 0 : i32
    %c0_i32_0 = arith.constant 0 : i32
    %c0_i32_1 = arith.constant 0 : i32
    return %c0_i32, %c0_i32_0 : i32, i32
  }
  func.func @transform_3(%arg0: i32) -> (i32, i32, i32) {
    %c0_i32 = arith.constant 0 : i32
    %c0_i32_0 = arith.constant 0 : i32
    %c0_i32_1 = arith.constant 0 : i32
    return %arg0, %c0_i32, %c0_i32_0 : i32, i32, i32
  }
}

</mosaic_0001>

<llo_original>
// kernel: decoder_layer_pallas.1
$region0: #{decoder_layer_pallas.1}
  #allocation0 [shape = 'u32[]', space=smem, size = 0x4, offset = 0x4, fixed_abs, tag = 'smem constant byte address 0x4 - core index']
  #allocation1 [shape = 'u32[144,128]{1,0:T(1,128)}', space=vmem, size = 0x12000, scoped, tag = 'internal scratch']
  %s0 = inlined_call_operand.vmem [shape: f32[2,36,384], index: 0, kind: input, shape index: {}]
  %s1 = inlined_call_operand.vmem [shape: f32[8,36], index: 1, kind: input, shape index: {}]
  %s2 = inlined_call_operand.vmem [shape: f32[8,1], index: 2, kind: input, shape index: {}]
  %s3 = inlined_call_operand.vmem [shape: f32[2,8,384], index: 3, kind: output, shape index: {}]
  %s4 = sld [smem:[#allocation0]]
  $region22: #{decoder_layer_pallas.1} parent=0
    _
  %s6 = ssub.s32 1, %s4
  %s7 = scalar_select 0, %s6, %s4
  // Predicated region
  $region2: #{decoder_layer_pallas.1} parent=0 // pred_check
    _
  $region3: #{decoder_layer_pallas.1} parent=0 // pred_check_branch
    %9 = sbr.rel (0) target = $region5
  $region4: #{decoder_layer_pallas.1} parent=0 // pred_region
    _
  $region5: #{decoder_layer_pallas.1} parent=0 // pred_fallthru
    _
  // Predicated region
  $region6: #{decoder_layer_pallas.1} parent=0 // pred_check
    _
  $region7: #{decoder_layer_pallas.1} parent=0 // pred_check_branch
    %11 = sbr.rel (0) target = $region9
  $region8: #{decoder_layer_pallas.1} parent=0 // pred_region
    _
  $region9: #{decoder_layer_pallas.1} parent=0 // pred_fallthru
    _
  // Predicated region
  $region10: #{decoder_layer_pallas.1} parent=0 // pred_check
    _
  $region11: #{decoder_layer_pallas.1} parent=0 // pred_check_branch
    %13 = sbr.rel (0) target = $region13
  $region12: #{decoder_layer_pallas.1} parent=0 // pred_region
    _
  $region13: #{decoder_layer_pallas.1} parent=0 // pred_fallthru
    _
  %v14 = vld [vmem:[%s1] sm:$0xff]
  %v15 = vld [vmem:[%s2] sm:$0xff]
  %v16 = vld [vmem:[%s0] sm:$0xff]
  %v17 = vld [vmem:[%s0 + $0x8] sm:$0xff]
  %v18 = vld [vmem:[%s0 + $0x10] sm:$0xff]
  %v19 = vld [vmem:[%s0 + $0x18] sm:$0xff]
  %v20 = vld [vmem:[%s0 + $0x20] sm:$0xff]
  %v21 = vld [vmem:[%s0 + $0x28] sm:$0xff]
  %v22 = vld [vmem:[%s0 + $0x30] sm:$0xff]
  %v23 = vld [vmem:[%s0 + $0x38] sm:$0xff]
  %v24 = vld [vmem:[%s0 + $0x40] sm:$0xff]
  %v25 = vld [vmem:[%s0 + $0x48] sm:$0xff]
  %v26 = vld [vmem:[%s0 + $0x50] sm:$0xff]
  %v27 = vld [vmem:[%s0 + $0x58] sm:$0xff]
  %v28 = vld [vmem:[%s0 + $0x60] sm:$0xf]
  %v29 = vld [vmem:[%s0 + $0x68] sm:$0xf]
  %v30 = vld [vmem:[%s0 + $0x70] sm:$0xf]
  %32 = vset.pattern.permute.xlu0 0
  %33 = vperm.xlu0 %32, %v15
  %v34 = vpop.permute.xlu0 %33
  %vm36 = vcmask 293888
  %v38 = vsel %vm36, %v14, 0
  %vm40 = vcmask 1043456
  %v42 = vsel %vm40, %v28, 0
  %v45 = vsel %vm40, %v29, 0
  %v48 = vsel %vm40, %v30, 0
  %50 = vmatprep.subr.mxu0 0.0
  %51 = vmatpush1.msra.mxu0 0.0
  %52 = vmatprep.subr.mxu0 0.0
  %53 = vmatpush1.msra.mxu0 0.0
  %54 = vmatprep.subr.mxu0 0.0
  %55 = vmatpush1.msra.mxu0 0.0
  %56 = vmatprep.subr.mxu0 0.0
  %57 = vmatpush1.msra.mxu0 0.0
  %58 = vmatprep.subr.mxu0 0.0
  %59 = vmatpush1.msra.mxu0 0.0
  %60 = vmatprep.subr.mxu0 0.0
  %61 = vmatpush1.msra.mxu0 0.0
  %62 = vmatprep.subr.mxu0 0.0
  %63 = vmatpush1.msra.mxu0 0.0
  %64 = vmatprep.subr.mxu0 0.0
  %65 = vmatpush1.msra.mxu0 0.0
  %66 = vmatprep.subr.mxu0 0.0
  %67 = vmatpush1.msra.mxu0 0.0
  %68 = vmatprep.subr.mxu0 0.0
  %69 = vmatpush1.msra.mxu0 0.0
  %70 = vmatprep.subr.mxu0 0.0
  %71 = vmatpush1.msra.mxu0 0.0
  %72 = vmatprep.subr.mxu0 %v45
  %73 = vmatpush1.msra.mxu0 %v42
  %74 = vmatprep.subr.mxu0 %v26
  %75 = vmatpush1.msra.mxu0 %v25
  %76 = vmatprep.subr.mxu0 %v23
  %77 = vmatpush1.msra.mxu0 %v22
  %78 = vmatprep.subr.mxu0 %v20
  %79 = vmatpush1.msra.mxu0 %v19
  %80 = vmatprep.subr.mxu0 %v17
  %81 = vmatpush1.msra.mxu0 %v16
  %82 = vmatprep.subr.mxu0 0.0
  %83 = vmatpush2.msra.mxu0 0.0
  %84 = vmatprep.subr.mxu0 0.0
  %85 = vmatpush2.msra.mxu0 0.0
  %86 = vmatprep.subr.mxu0 0.0
  %87 = vmatpush2.msra.mxu0 0.0
  %88 = vmatprep.subr.mxu0 0.0
  %89 = vmatpush2.msra.mxu0 0.0
  %90 = vmatprep.subr.mxu0 0.0
  %91 = vmatpush2.msra.mxu0 0.0
  %92 = vmatprep.subr.mxu0 0.0
  %93 = vmatpush2.msra.mxu0 0.0
  %94 = vmatprep.subr.mxu0 0.0
  %95 = vmatpush2.msra.mxu0 0.0
  %96 = vmatprep.subr.mxu0 0.0
  %97 = vmatpush2.msra.mxu0 0.0
  %98 = vmatprep.subr.mxu0 0.0
  %99 = vmatpush2.msra.mxu0 0.0
  %100 = vmatprep.subr.mxu0 0.0
  %101 = vmatpush2.msra.mxu0 0.0
  %102 = vmatprep.subr.mxu0 0.0
  %103 = vmatpush2.msra.mxu0 0.0
  %104 = vmatprep.subr.mxu0 0.0
  %105 = vmatpush2.msra.mxu0 0.0
  %106 = vmatprep.subr.mxu0 0.0
  %107 = vmatpush2.msra.mxu0 0.0
  %108 = vmatprep.subr.mxu0 0.0
  %109 = vmatpush2.msra.mxu0 0.0
  %110 = vmatprep.subr.mxu0 0.0
  %111 = vmatpush2.msra.mxu0 0.0
  %112 = vmatprep.subr.mxu0 0.0
  %113 = vmatpush2.msra.mxu0 0.0
  %114 = vmatprep.mubr.f32.mxu0 0.0
  %115 = vmatmul.mubr.f32.gmra.mxu0 %v38
  %v116 = vpop.f32.mrf.mxu0
  %v117 = vadd.f32 %v34, %v116
  %v118 = vpop.f32.mrf.mxu0
  %v119 = vadd.f32 %v34, %v118
  %120 = vdwg.mxu0
  %121 = vmatprep.subr.mxu0 0.0
  %122 = vmatpush1.msra.mxu0 0.0
  %123 = vmatprep.subr.mxu0 0.0
  %124 = vmatpush1.msra.mxu0 0.0
  %125 = vmatprep.subr.mxu0 0.0
  %126 = vmatpush1.msra.mxu0 0.0
  %127 = vmatprep.subr.mxu0 0.0
  %128 = vmatpush1.msra.mxu0 0.0
  %129 = vmatprep.subr.mxu0 0.0
  %130 = vmatpush1.msra.mxu0 0.0
  %131 = vmatprep.subr.mxu0 0.0
  %132 = vmatpush1.msra.mxu0 0.0
  %133 = vmatprep.subr.mxu0 0.0
  %134 = vmatpush1.msra.mxu0 0.0
  %135 = vmatprep.subr.mxu0 0.0
  %136 = vmatpush1.msra.mxu0 0.0
  %137 = vmatprep.subr.mxu0 0.0
  %138 = vmatpush1.msra.mxu0 0.0
  %139 = vmatprep.subr.mxu0 0.0
  %140 = vmatpush1.msra.mxu0 0.0
  %141 = vmatprep.subr.mxu0 0.0
  %142 = vmatpush1.msra.mxu0 0.0
  %143 = vmatprep.subr.mxu0 0.0
  %144 = vmatpush1.msra.mxu0 %v48
  %145 = vmatprep.subr.mxu0 0.0
  %146 = vmatpush1.msra.mxu0 %v27
  %147 = vmatprep.subr.mxu0 0.0
  %148 = vmatpush1.msra.mxu0 %v24
  %149 = vmatprep.subr.mxu0 0.0
  %150 = vmatpush1.msra.mxu0 %v21
  %151 = vmatprep.subr.mxu0 0.0
  %152 = vmatpush1.msra.mxu0 %v18
  %153 = vmatprep.subr.mxu0 0.0
  %154 = vmatpush2.msra.mxu0 0.0
  %155 = vmatprep.subr.mxu0 0.0
  %156 = vmatpush2.msra.mxu0 0.0
  %157 = vmatprep.subr.mxu0 0.0
  %158 = vmatpush2.msra.mxu0 0.0
  %159 = vmatprep.subr.mxu0 0.0
  %160 = vmatpush2.msra.mxu0 0.0
  %161 = vmatprep.subr.mxu0 0.0
  %162 = vmatpush2.msra.mxu0 0.0
  %163 = vmatprep.subr.mxu0 0.0
  %164 = vmatpush2.msra.mxu0 0.0
  %165 = vmatprep.subr.mxu0 0.0
  %166 = vmatpush2.msra.mxu0 0.0
  %167 = vmatprep.subr.mxu0 0.0
  %168 = vmatpush2.msra.mxu0 0.0
  %169 = vmatprep.subr.mxu0 0.0
  %170 = vmatpush2.msra.mxu0 0.0
  %171 = vmatprep.subr.mxu0 0.0
  %172 = vmatpush2.msra.mxu0 0.0
  %173 = vmatprep.subr.mxu0 0.0
  %174 = vmatpush2.msra.mxu0 0.0
  %175 = vmatprep.subr.mxu0 0.0
  %176 = vmatpush2.msra.mxu0 0.0
  %177 = vmatprep.subr.mxu0 0.0
  %178 = vmatpush2.msra.mxu0 0.0
  %179 = vmatprep.subr.mxu0 0.0
  %180 = vmatpush2.msra.mxu0 0.0
  %181 = vmatprep.subr.mxu0 0.0
  %182 = vmatpush2.msra.mxu0 0.0
  %183 = vmatprep.subr.mxu0 0.0
  %184 = vmatpush2.msra.mxu0 0.0
  %185 = vmatprep.mubr.f32.mxu0 0.0
  %186 = vmatmul.mubr.f32.gmra.mxu0 %v38
  %v187 = vpop.f32.mrf.mxu0
  %v188 = vadd.f32 %v34, %v187
  %v189 = vpop.f32.mrf.mxu0
  %190 = vdwg.mxu0
  %v191 = vmax.f32 %v117, 0.0
  %v192 = vmax.f32 %v119, 0.0
  %v193 = vmax.f32 %v188, 0.0
  %194 = vst [vmem:[%s3] sm:$0xff] %v191
  %195 = vst [vmem:[%s3 + $0x8] sm:$0xff] %v192
  %196 = vst [vmem:[%s3 + $0x10] sm:$0xff] %v193
  %s197 = scalar_lea.vmem %s0, 120
  %v198 = vld [vmem:[%s197] sm:$0xff]
  %v199 = vld [vmem:[%s197 + $0x8] sm:$0xff]
  %v200 = vld [vmem:[%s197 + $0x10] sm:$0xff]
  %v201 = vld [vmem:[%s197 + $0x18] sm:$0xff]
  %v202 = vld [vmem:[%s197 + $0x20] sm:$0xff]
  %v203 = vld [vmem:[%s197 + $0x28] sm:$0xff]
  %v204 = vld [vmem:[%s197 + $0x30] sm:$0xff]
  %v205 = vld [vmem:[%s197 + $0x38] sm:$0xff]
  %v206 = vld [vmem:[%s197 + $0x40] sm:$0xff]
  %v207 = vld [vmem:[%s197 + $0x48] sm:$0xff]
  %v208 = vld [vmem:[%s197 + $0x50] sm:$0xff]
  %v209 = vld [vmem:[%s197 + $0x58] sm:$0xff]
  %v210 = vld [vmem:[%s197 + $0x60] sm:$0xf]
  %v211 = vld [vmem:[%s197 + $0x68] sm:$0xf]
  %v212 = vld [vmem:[%s197 + $0x70] sm:$0xf]
  %v214 = vsel %vm40, %v210, 0
  %v217 = vsel %vm40, %v211, 0
  %v220 = vsel %vm40, %v212, 0
  %222 = vmatprep.subr.mxu0 0.0
  %223 = vmatpush1.msra.mxu0 0.0
  %224 = vmatprep.subr.mxu0 0.0
  %225 = vmatpush1.msra.mxu0 0.0
  %226 = vmatprep.subr.mxu0 0.0
  %227 = vmatpush1.msra.mxu0 0.0
  %228 = vmatprep.subr.mxu0 0.0
  %229 = vmatpush1.msra.mxu0 0.0
  %230 = vmatprep.subr.mxu0 0.0
  %231 = vmatpush1.msra.mxu0 0.0
  %232 = vmatprep.subr.mxu0 0.0
  %233 = vmatpush1.msra.mxu0 0.0
  %234 = vmatprep.subr.mxu0 0.0
  %235 = vmatpush1.msra.mxu0 0.0
  %236 = vmatprep.subr.mxu0 0.0
  %237 = vmatpush1.msra.mxu0 0.0
  %238 = vmatprep.subr.mxu0 0.0
  %239 = vmatpush1.msra.mxu0 0.0
  %240 = vmatprep.subr.mxu0 0.0
  %241 = vmatpush1.msra.mxu0 0.0
  %242 = vmatprep.subr.mxu0 0.0
  %243 = vmatpush1.msra.mxu0 0.0
  %244 = vmatprep.subr.mxu0 %v217
  %245 = vmatpush1.msra.mxu0 %v214
  %246 = vmatprep.subr.mxu0 %v208
  %247 = vmatpush1.msra.mxu0 %v207
  %248 = vmatprep.subr.mxu0 %v205
  %249 = vmatpush1.msra.mxu0 %v204
  %250 = vmatprep.subr.mxu0 %v202
  %251 = vmatpush1.msra.mxu0 %v201
  %252 = vmatprep.subr.mxu0 %v199
  %253 = vmatpush1.msra.mxu0 %v198
  %254 = vmatprep.subr.mxu0 0.0
  %255 = vmatpush2.msra.mxu0 0.0
  %256 = vmatprep.subr.mxu0 0.0
  %257 = vmatpush2.msra.mxu0 0.0
  %258 = vmatprep.subr.mxu0 0.0
  %259 = vmatpush2.msra.mxu0 0.0
  %260 = vmatprep.subr.mxu0 0.0
  %261 = vmatpush2.msra.mxu0 0.0
  %262 = vmatprep.subr.mxu0 0.0
  %263 = vmatpush2.msra.mxu0 0.0
  %264 = vmatprep.subr.mxu0 0.0
  %265 = vmatpush2.msra.mxu0 0.0
  %266 = vmatprep.subr.mxu0 0.0
  %267 = vmatpush2.msra.mxu0 0.0
  %268 = vmatprep.subr.mxu0 0.0
  %269 = vmatpush2.msra.mxu0 0.0
  %270 = vmatprep.subr.mxu0 0.0
  %271 = vmatpush2.msra.mxu0 0.0
  %272 = vmatprep.subr.mxu0 0.0
  %273 = vmatpush2.msra.mxu0 0.0
  %274 = vmatprep.subr.mxu0 0.0
  %275 = vmatpush2.msra.mxu0 0.0
  %276 = vmatprep.subr.mxu0 0.0
  %277 = vmatpush2.msra.mxu0 0.0
  %278 = vmatprep.subr.mxu0 0.0
  %279 = vmatpush2.msra.mxu0 0.0
  %280 = vmatprep.subr.mxu0 0.0
  %281 = vmatpush2.msra.mxu0 0.0
  %282 = vmatprep.subr.mxu0 0.0
  %283 = vmatpush2.msra.mxu0 0.0
  %284 = vmatprep.subr.mxu0 0.0
  %285 = vmatpush2.msra.mxu0 0.0
  %286 = vmatprep.mubr.f32.mxu0 0.0
  %287 = vmatmul.mubr.f32.gmra.mxu0 %v38
  %v288 = vpop.f32.mrf.mxu0
  %v289 = vadd.f32 %v34, %v288
  %v290 = vpop.f32.mrf.mxu0
  %v291 = vadd.f32 %v34, %v290
  %292 = vdwg.mxu0
  %293 = vmatprep.subr.mxu0 0.0
  %294 = vmatpush1.msra.mxu0 0.0
  %295 = vmatprep.subr.mxu0 0.0
  %296 = vmatpush1.msra.mxu0 0.0
  %297 = vmatprep.subr.mxu0 0.0
  %298 = vmatpush1.msra.mxu0 0.0
  %299 = vmatprep.subr.mxu0 0.0
  %300 = vmatpush1.msra.mxu0 0.0
  %301 = vmatprep.subr.mxu0 0.0
  %302 = vmatpush1.msra.mxu0 0.0
  %303 = vmatprep.subr.mxu0 0.0
  %304 = vmatpush1.msra.mxu0 0.0
  %305 = vmatprep.subr.mxu0 0.0
  %306 = vmatpush1.msra.mxu0 0.0
  %307 = vmatprep.subr.mxu0 0.0
  %308 = vmatpush1.msra.mxu0 0.0
  %309 = vmatprep.subr.mxu0 0.0
  %310 = vmatpush1.msra.mxu0 0.0
  %311 = vmatprep.subr.mxu0 0.0
  %312 = vmatpush1.msra.mxu0 0.0
  %313 = vmatprep.subr.mxu0 0.0
  %314 = vmatpush1.msra.mxu0 0.0
  %315 = vmatprep.subr.mxu0 0.0
  %316 = vmatpush1.msra.mxu0 %v220
  %317 = vmatprep.subr.mxu0 0.0
  %318 = vmatpush1.msra.mxu0 %v209
  %319 = vmatprep.subr.mxu0 0.0
  %320 = vmatpush1.msra.mxu0 %v206
  %321 = vmatprep.subr.mxu0 0.0
  %322 = vmatpush1.msra.mxu0 %v203
  %323 = vmatprep.subr.mxu0 0.0
  %324 = vmatpush1.msra.mxu0 %v200
  %325 = vmatprep.subr.mxu0 0.0
  %326 = vmatpush2.msra.mxu0 0.0
  %327 = vmatprep.subr.mxu0 0.0
  %328 = vmatpush2.msra.mxu0 0.0
  %329 = vmatprep.subr.mxu0 0.0
  %330 = vmatpush2.msra.mxu0 0.0
  %331 = vmatprep.subr.mxu0 0.0
  %332 = vmatpush2.msra.mxu0 0.0
  %333 = vmatprep.subr.mxu0 0.0
  %334 = vmatpush2.msra.mxu0 0.0
  %335 = vmatprep.subr.mxu0 0.0
  %336 = vmatpush2.msra.mxu0 0.0
  %337 = vmatprep.subr.mxu0 0.0
  %338 = vmatpush2.msra.mxu0 0.0
  %339 = vmatprep.subr.mxu0 0.0
  %340 = vmatpush2.msra.mxu0 0.0
  %341 = vmatprep.subr.mxu0 0.0
  %342 = vmatpush2.msra.mxu0 0.0
  %343 = vmatprep.subr.mxu0 0.0
  %344 = vmatpush2.msra.mxu0 0.0
  %345 = vmatprep.subr.mxu0 0.0
  %346 = vmatpush2.msra.mxu0 0.0
  %347 = vmatprep.subr.mxu0 0.0
  %348 = vmatpush2.msra.mxu0 0.0
  %349 = vmatprep.subr.mxu0 0.0
  %350 = vmatpush2.msra.mxu0 0.0
  %351 = vmatprep.subr.mxu0 0.0
  %352 = vmatpush2.msra.mxu0 0.0
  %353 = vmatprep.subr.mxu0 0.0
  %354 = vmatpush2.msra.mxu0 0.0
  %355 = vmatprep.subr.mxu0 0.0
  %356 = vmatpush2.msra.mxu0 0.0
  %357 = vmatprep.mubr.f32.mxu0 0.0
  %358 = vmatmul.mubr.f32.gmra.mxu0 %v38
  %v359 = vpop.f32.mrf.mxu0
  %v360 = vadd.f32 %v34, %v359
  %v361 = vpop.f32.mrf.mxu0
  %362 = vdwg.mxu0
  %v363 = vmax.f32 %v289, 0.0
  %v364 = vmax.f32 %v291, 0.0
  %v365 = vmax.f32 %v360, 0.0
  %s366 = scalar_lea.vmem %s3, 24
  %367 = vst [vmem:[%s366] sm:$0xff] %v363
  %368 = vst [vmem:[%s366 + $0x8] sm:$0xff] %v364
  %369 = vst [vmem:[%s366 + $0x10] sm:$0xff] %v365
  // Predicated region
  $region14: #{decoder_layer_pallas.1} parent=0 // pred_check
    _
  $region15: #{decoder_layer_pallas.1} parent=0 // pred_check_branch
    %371 = sbr.rel (0) target = $region17
  $region16: #{decoder_layer_pallas.1} parent=0 // pred_region
    _
  $region17: #{decoder_layer_pallas.1} parent=0 // pred_fallthru
    _
  // Predicated region
  $region18: #{decoder_layer_pallas.1} parent=0 // pred_check
    _
  $region19: #{decoder_layer_pallas.1} parent=0 // pred_check_branch
    %373 = sbr.rel (0) target = $region21
  $region20: #{decoder_layer_pallas.1} parent=0 // pred_region
    _
  $region21: #{decoder_layer_pallas.1} parent=0 // pred_fallthru
    _

</llo_original>
